<compile_context>
chip_gen: v7x
topology: tpu7x:2x2x1
jax: 0.10.0
libtpu: 0.0.40
codegen_flags: <defaults>
</compile_context>

<pallas_src>
import math

import jax
import jax.numpy as jnp
from jax.experimental import pallas as pl
from jax.experimental.pallas import tpu as pltpu


def _cdiv(a, b):
    return -(-a // b)


def _round_up(a, b):
    return _cdiv(a, b) * b


def _rprelu_kernel(x_ref, p_ref, o_ref):
    # p_ref rows: 0 = move1, 1 = alpha, 2 = move2 (float32); each (1, W)
    # broadcasts over the row axis. ~6 VPU ops/element (sub, cmp, mul, select,
    # add, cast) — far below the HBM feed rate, so no micro-optimization needed.
    x = x_ref[...].astype(jnp.float32)
    s = x - p_ref[0:1, :]
    y = jnp.where(s >= 0, s, s * p_ref[1:2, :]) + p_ref[2:3, :]
    o_ref[...] = y.astype(o_ref.dtype)


def rprelu_fold_factor(hidden_size):
    """Smallest f such that f * hidden_size is a multiple of 128 lanes."""
    return 128 // math.gcd(hidden_size, 128)


def pack_rprelu_params(move1, alpha, move2):
    """Pack per-channel params once per layer into a single (3, f*H) f32 operand."""
    H = move1.shape[-1]
    f = rprelu_fold_factor(H)
    return jnp.stack(
        [
            jnp.tile(move1.astype(jnp.float32).reshape(-1), f),
            jnp.tile(alpha.astype(jnp.float32).reshape(-1), f),
            jnp.tile(move2.astype(jnp.float32).reshape(-1), f),
        ],
        axis=0,
    )


def rprelu(x, move1=None, alpha=None, move2=None, *, packed_params=None,
           target_tile_bytes=4 * 1024 * 1024):
    """RPReLU forward. x: (..., H); move1/alpha/move2: (H,). Returns x.shape.

    Pass `packed_params=pack_rprelu_params(move1, alpha, move2)` (precomputed
    once per layer) to keep parameter packing out of the per-call hot path.
    """
    orig_shape = x.shape
    H = orig_shape[-1]
    dtype = x.dtype
    itemsize = jnp.dtype(dtype).itemsize
    total = math.prod(orig_shape)

    f = rprelu_fold_factor(H)
    W = f * H

    if packed_params is None:
        packed_params = pack_rprelu_params(move1, alpha, move2)
    assert packed_params.shape == (3, W), (packed_params.shape, (3, W))

    # Sublane packing granularity for the activation dtype (8 f32, 16 bf16, 32 i8).
    pack = max(8, 32 // itemsize)

    # Pad only to a whole number of W-wide rows (usually 0, at most W-1 elems).
    rows = _cdiv(total, W)
    pad = rows * W - total
    x_flat = x.reshape(-1)
    if pad:
        x_flat = jnp.pad(x_flat, (0, pad))
    x2 = x_flat.reshape(rows, W)

    # Row block: as large as target_tile_bytes allows, but split into >=2
    # (preferably an even number of) grid steps so both v7x TensorCores get
    # balanced work. The last block may be ragged: Pallas pads boundary reads
    # and masks boundary writes (no reductions, so garbage lanes are discarded).
    if rows <= pack:
        row_block = rows                      # single block == full array dim
    else:
        max_block = max(pack, (target_tile_bytes // (W * itemsize)) // pack * pack)
        nblk = max(_cdiv(rows, max_block), 2)
        if nblk % 2:
            nblk += 1
        row_block = min(max_block, _round_up(_cdiv(rows, nblk), pack))
    grid = (_cdiv(rows, row_block),)

    out2 = pl.pallas_call(
        _rprelu_kernel,
        out_shape=jax.ShapeDtypeStruct((rows, W), dtype),
        grid_spec=pltpu.PrefetchScalarGridSpec(
            num_scalar_prefetch=0,
            grid=grid,
            in_specs=[
                pl.BlockSpec((row_block, W), lambda i: (i, 0)),  # x tile (lane-dense)
                pl.BlockSpec((3, W), lambda i: (0, 0)),          # packed params (resident)
            ],
            out_specs=pl.BlockSpec((row_block, W), lambda i: (i, 0)),
        ),
        compiler_params=pltpu.CompilerParams(
            dimension_semantics=("parallel",),
            vmem_limit_bytes=32 * 1024 * 1024,
        ),
        cost_estimate=pl.CostEstimate(
            flops=6 * rows * W,
            bytes_accessed=2 * rows * W * itemsize + 3 * W * 4,
            transcendentals=0,
        ),
    )(x2, packed_params)

    out_flat = out2.reshape(-1)
    if pad:
        out_flat = out_flat[:total]
    return out_flat.reshape(orig_shape)


def rprelu_reference(x, move1, alpha, move2):
    s = x - move1
    return jnp.where(s >= 0, s, alpha * s) + move2


if __name__ == "__main__":
    key = jax.random.PRNGKey(0)
    kx, k1, k2, k3, kx2, kx3 = jax.random.split(key, 6)

    B, N, H = 2, 8, 32
    x = jax.random.normal(kx, (B, N, H), dtype=jnp.float32)
    # Deterministic, nonzero params (module defaults of zeros / 0.25 would be degenerate).
    move1 = 0.1 * jax.random.normal(k1, (H,), dtype=jnp.float32)
    move2 = 0.1 * jax.random.normal(k2, (H,), dtype=jnp.float32)
    alpha = jnp.full((H,), 0.25, dtype=jnp.float32) + 0.05 * jax.random.normal(
        k3, (H,), dtype=jnp.float32
    )

    # Pack parameters once per layer (hoisted out of the per-call hot path).
    packed = pack_rprelu_params(move1, alpha, move2)

    out = jax.block_until_ready(rprelu(x, packed_params=packed))
    ref = rprelu_reference(x, move1, alpha, move2)
    assert out.shape == (B, N, H)
    assert jnp.allclose(out, ref, atol=1e-6, rtol=1e-6), "mismatch vs reference"

    # Ragged tail: total elements not a multiple of the folded lane width W.
    x_odd = jax.random.normal(kx2, (1, 5, H), dtype=jnp.float32)
    out_odd = jax.block_until_ready(rprelu(x_odd, move1, alpha, move2))
    ref_odd = rprelu_reference(x_odd, move1, alpha, move2)
    assert jnp.allclose(out_odd, ref_odd, atol=1e-6, rtol=1e-6), "mismatch (padded tail)"

    # Ragged grid: row count not a multiple of row_block -> masked boundary block.
    x_rag = jax.random.normal(kx3, (5, 8, H), dtype=jnp.float32)
    out_rag = jax.block_until_ready(
        rprelu(x_rag, packed_params=packed, target_tile_bytes=4096)
    )
    ref_rag = rprelu_reference(x_rag, move1, alpha, move2)
    assert jnp.allclose(out_rag, ref_rag, atol=1e-6, rtol=1e-6), "mismatch (ragged grid)"

    # bf16 activations: params stay f32 inside the kernel, only the output is cast.
    xb = x.astype(jnp.bfloat16)
    out_b = jax.block_until_ready(rprelu(xb, packed_params=packed))
    ref_b = rprelu_reference(xb.astype(jnp.float32), move1, alpha, move2)
    assert out_b.dtype == jnp.bfloat16
    assert jnp.allclose(out_b.astype(jnp.float32), ref_b, atol=2e-2, rtol=2e-2), "mismatch (bf16)"

    print("KERNEL_OK")
</pallas_src>

<mosaic_0001>
module attributes {stable_mosaic.version = 11 : i64} {
  func.func @_rprelu_kernel(%arg0: i32, %arg1: memref<4x128xf32, #tpu.memory_space<vmem>>, %arg2: memref<3x128xf32, #tpu.memory_space<vmem>>, %arg3: memref<4x128xf32, #tpu.memory_space<vmem>>) attributes {dimension_semantics = [#tpu.dimension_semantics<parallel>], iteration_bounds = array<i64: 1>, scalar_prefetch = 0 : i64, scratch_operands = 0 : i64, tpu.core_type = #tpu.core_type<tc>, window_params = [{transform_indices = @transform_0, window_bounds = array<i64: 4, 128>}, {pipeline_mode = #tpu.pipeline_mode<synchronous>, transform_indices = @transform_1, window_bounds = array<i64: 3, 128>}, {transform_indices = @transform_2, window_bounds = array<i64: 4, 128>}]} {
    %c0 = arith.constant 0 : index
    %c0_0 = arith.constant 0 : index
    %0 = vector.load %arg1[%c0, %c0_0] : memref<4x128xf32, #tpu.memory_space<vmem>>, vector<4x128xf32>
    %c0_1 = arith.constant 0 : index
    %c0_2 = arith.constant 0 : index
    %1 = vector.load %arg2[%c0_1, %c0_2] : memref<3x128xf32, #tpu.memory_space<vmem>>, vector<1x128xf32>
    %2 = vector.broadcast %1 : vector<1x128xf32> to vector<4x128xf32>
    %3 = arith.subf %0, %2 : vector<4x128xf32>
    %cst = arith.constant 0.000000e+00 : f32
    %4 = vector.broadcast %cst : f32 to vector<4x128xf32>
    %5 = arith.cmpf oge, %3, %4 : vector<4x128xf32>
    %c1 = arith.constant 1 : index
    %c0_3 = arith.constant 0 : index
    %6 = vector.load %arg2[%c1, %c0_3] : memref<3x128xf32, #tpu.memory_space<vmem>>, vector<1x128xf32>
    %7 = vector.broadcast %6 : vector<1x128xf32> to vector<4x128xf32>
    %8 = arith.mulf %3, %7 : vector<4x128xf32>
    %9 = arith.select %5, %3, %8 : vector<4x128xi1>, vector<4x128xf32>
    %c2 = arith.constant 2 : index
    %c0_4 = arith.constant 0 : index
    %10 = vector.load %arg2[%c2, %c0_4] : memref<3x128xf32, #tpu.memory_space<vmem>>, vector<1x128xf32>
    %11 = vector.broadcast %10 : vector<1x128xf32> to vector<4x128xf32>
    %12 = arith.addf %9, %11 : vector<4x128xf32>
    %c0_5 = arith.constant 0 : index
    %c0_6 = arith.constant 0 : index
    %13 = vector.load %arg3[%c0_5, %c0_6] : memref<4x128xf32, #tpu.memory_space<vmem>>, vector<4x128xf32>
    tpu.vector_store %arg3[%c0_5, %c0_6], %12 {strides = array<i32>} : memref<4x128xf32, #tpu.memory_space<vmem>>, vector<4x128xf32>,
    return
  }
  func.func @transform_0(%arg0: i32) -> (i32, i32) {
    %c0_i32 = arith.constant 0 : i32
    %c0_i32_0 = arith.constant 0 : i32
    return %arg0, %c0_i32 : i32, i32
  }
  func.func @transform_1(%arg0: i32) -> (i32, i32) {
    %c0_i32 = arith.constant 0 : i32
    %c0_i32_0 = arith.constant 0 : i32
    %c0_i32_1 = arith.constant 0 : i32
    return %c0_i32, %c0_i32_0 : i32, i32
  }
  func.func @transform_2(%arg0: i32) -> (i32, i32) {
    %c0_i32 = arith.constant 0 : i32
    %c0_i32_0 = arith.constant 0 : i32
    return %arg0, %c0_i32 : i32, i32
  }
}

</mosaic_0001>

<llo_original>
// kernel: tpu_custom_call.1
$region0: #{tpu_custom_call.1}
  #allocation0 [shape = 'u32[]', space=smem, size = 0x4, offset = 0x4, fixed_abs, tag = 'smem constant byte address 0x4 - core index']
  #allocation1 [shape = 'u32[144,128]{1,0:T(1,128)}', space=vmem, size = 0x12000, scoped, tag = 'internal scratch']
  %s0 = inlined_call_operand.hbm [shape: f32[4,128], index: 0, kind: input, shape index: {}]
  %s1 = inlined_call_operand.hbm [shape: f32[3,128], index: 1, kind: input, shape index: {}]
  %s2 = inlined_call_operand.hbm [shape: f32[4,128], index: 2, kind: output, shape index: {}]
  %s3 = sld [smem:[#allocation0]]
  $region26: #{tpu_custom_call.1} parent=0
    _
  %s5 = ssub.s32 1, %s3
  %s6 = scalar_select 0, %s5, %s3
  $region1: #{tpu_custom_call.1} parent=0
    #allocation2 [shape = 'u8[2048]{0}', space=vmem, size = 0x800, scoped, tag = 'input window, operand 0, single buffered']
    #allocation3 [shape = 's32[1]{0}', space=sflag, size = 0x4, scoped, tag = 'scoped memory for tpu_custom_call.1']
    #allocation4 [shape = 's32[1]{0}', space=sflag, size = 0x4, scoped, tag = 'scoped memory for tpu_custom_call.1']
    #allocation5 [shape = 'u8[2048]{0}', space=vmem, size = 0x800, scoped, tag = 'input window, operand 1, single buffered']
    #allocation6 [shape = 's32[1]{0}', space=sflag, size = 0x4, scoped, tag = 'scoped memory for tpu_custom_call.1']
    #allocation7 [shape = 'u8[2048]{0}', space=vmem, size = 0x800, scoped, tag = 'output window, operand 0, single buffered']
    %7 = vsyncpa [#allocation3], 0
    %8 = vsyncpa [#allocation6], 0
    %9 = vsyncpa [#allocation4], 0
    // Predicated region
    $region2: #{tpu_custom_call.1} parent=1 // pred_check
      _
    $region3: #{tpu_custom_call.1} parent=1 // pred_check_branch
      %11 = sbr.rel (0) target = $region5
    $region4: #{tpu_custom_call.1} parent=1 // pred_region
      %s13 = ssub.s32 64, 64
      %14 = vsyncadd [#allocation3], %s13
      %s16 = sshll.u32 [#allocation2], 4
      %s17 = int_to_ptr.vmem [resolvable:$true] %s16
      %19 = dma.hbm_to_vmem [thread:$0]  %s0, 64, %s17, [#allocation3]
    $region5: #{tpu_custom_call.1} parent=1 // pred_fallthru
      _
    // Predicated region
    $region6: #{tpu_custom_call.1} parent=1 // pred_check
      _
    $region7: #{tpu_custom_call.1} parent=1 // pred_check_branch
      %21 = sbr.rel (0) target = $region9
    $region8: #{tpu_custom_call.1} parent=1 // pred_region
      %s23 = ssub.s32 64, 64
      %24 = vsyncadd [#allocation6], %s23
      %s26 = sshll.u32 [#allocation5], 4
      %s27 = int_to_ptr.vmem [resolvable:$true] %s26
      %29 = dma.hbm_to_vmem [thread:$0]  %s1, 64, %s27, [#allocation6]
    $region9: #{tpu_custom_call.1} parent=1 // pred_fallthru
      _
    // Predicated region
    $region10: #{tpu_custom_call.1} parent=1 // pred_check
      _
    $region11: #{tpu_custom_call.1} parent=1 // pred_check_branch
      %31 = sbr.rel (0) target = $region13
    $region12: #{tpu_custom_call.1} parent=1 // pred_region
      %32 = dma.done [#allocation3], 64
    $region13: #{tpu_custom_call.1} parent=1 // pred_fallthru
      _
    // Predicated region
    $region14: #{tpu_custom_call.1} parent=1 // pred_check
      _
    $region15: #{tpu_custom_call.1} parent=1 // pred_check_branch
      %34 = sbr.rel (0) target = $region17
    $region16: #{tpu_custom_call.1} parent=1 // pred_region
      %35 = dma.done [#allocation6], 64
    $region17: #{tpu_custom_call.1} parent=1 // pred_fallthru
      _
    %v36 = vld [vmem:[#allocation2] sm:$0xf]
    %v37 = vld [vmem:[#allocation5] sm:$0x1]
    %v38 = vlaneseq
    %v39 = vshrl.u32 %v38, 7
    %v40 = vsub.s32 0, %v39
    %v41 = vrot.slane %v37, %v40
    %v42 = vsub.f32 %v36, %v41
    %vm43 = vcmp.ge.f32.partialorder %v42, 0.0
    %v44 = vld [vmem:[#allocation5 + $0x1] sm:$0x1]
    %v45 = vlaneseq
    %v46 = vshrl.u32 %v45, 7
    %v47 = vsub.s32 0, %v46
    %v48 = vrot.slane %v44, %v47
    %v49 = vmul.f32 %v42, %v48
    %v50 = vsel %vm43, %v42, %v49
    %v51 = vld [vmem:[#allocation5 + $0x2] sm:$0x1]
    %v52 = vlaneseq
    %v53 = vshrl.u32 %v52, 7
    %v54 = vsub.s32 0, %v53
    %v55 = vrot.slane %v51, %v54
    %v56 = vadd.f32 %v50, %v55
    %57 = vst [vmem:[#allocation7] sm:$0xf] %v56
    // Predicated region
    $region18: #{tpu_custom_call.1} parent=1 // pred_check
      _
    $region19: #{tpu_custom_call.1} parent=1 // pred_check_branch
      %59 = sbr.rel (0) target = $region21
    $region20: #{tpu_custom_call.1} parent=1 // pred_region
      %s61 = ssub.s32 64, 64
      %62 = vsyncadd [#allocation4], %s61
      %s64 = sshll.u32 [#allocation7], 4
      %s65 = int_to_ptr.vmem [resolvable:$true] %s64
      %67 = dma.vmem_to_hbm [thread:$0]  %s65, 64, %s2, [#allocation4]
    $region21: #{tpu_custom_call.1} parent=1 // pred_fallthru
      _
    // Predicated region
    $region22: #{tpu_custom_call.1} parent=1 // pred_check
      _
    $region23: #{tpu_custom_call.1} parent=1 // pred_check_branch
      %69 = sbr.rel (0) target = $region25
    $region24: #{tpu_custom_call.1} parent=1 // pred_region
      %70 = dma.done [#allocation4], 64
    $region25: #{tpu_custom_call.1} parent=1 // pred_fallthru
      _
    %71 = vsyncpa [#allocation3], 1
    %72 = vsyncpa [#allocation6], 1
    %73 = vsyncpa [#allocation4], 1

</llo_original>
